<compile_context>
chip_gen: v7x
topology: tpu7x:2x2x1
jax: 0.10.0
libtpu: 0.0.40
codegen_flags: <defaults>
</compile_context>

<pallas_src>
import functools

import jax
import jax.numpy as jnp
from jax.experimental import pallas as pl
from jax.experimental.pallas import tpu as pltpu


# --------------------------------------------------------------------------- #
# Kernel
# --------------------------------------------------------------------------- #
def _sparse_loss_kernel(bt_ref, out_ref, acc_ref, *, dim, norm_axis, apply_tanh,
                        tile_b, tiles_per_part, n_tiles, batch, needs_mask):
    """Per-(partial, tile) kernel.

    acc_ref : (8, cols) f32 VMEM scratch, lane/sublane-dense accumulator.
    out_ref : (1, 1, cols) block, written once per partial at the last tile.
    cols = 1 for the (dim==2, norm_axis==1) scalar path, else cols = feat.
    """
    p = pl.program_id(0)
    t = pl.program_id(1)

    @pl.when(t == 0)
    def _init():
        acc_ref[...] = jnp.zeros_like(acc_ref)

    def accumulate(masked):
        x = bt_ref[...].astype(jnp.float32)
        if masked:
            # Only the single ragged boundary tile runs this path.
            tile_idx = p * tiles_per_part + t
            rows = tile_idx * tile_b + jax.lax.broadcasted_iota(
                jnp.int32, x.shape, 0)
            x = jnp.where(rows < batch, x, 0.0)

        if dim == 1:
            y = jnp.abs(x)                                        # (rows, feat)
        else:  # dim == 2
            if apply_tanh:
                x = jnp.tanh(x)                                   # single EUP op
            sq = x * x
            if norm_axis == 1:
                # Per-row L2^2 (cross-lane reduce is inherent to the norm),
                # then the module's double sqrt on the narrow (rows, 1) vector.
                row_l2sq = jnp.sum(sq, axis=1, keepdims=True)     # (rows, 1)
                y = jnp.sqrt(jnp.sqrt(row_l2sq))                  # (rows, 1)
            else:
                # norm over the batch axis: per-feature sum of squares.
                y = sq                                            # (rows, feat)

        rows_n, cols = y.shape
        if rows_n % 8 == 0 and rows_n > 8:
            # Sublane-group fold: pure vreg adds, no XLU reduce, unmasked store.
            acc_ref[...] += jnp.sum(y.reshape(rows_n // 8, 8, cols), axis=0)
        elif rows_n == 8:
            acc_ref[...] += y
        else:
            # Tiny / ragged single-block case (rows not a multiple of 8).
            acc_ref[0:1, :] += jnp.sum(y, axis=0, keepdims=True)

    if needs_mask:
        is_boundary = (p * tiles_per_part + t) == (n_tiles - 1)

        @pl.when(is_boundary)
        def _masked_tile():
            accumulate(True)

        @pl.when(jnp.logical_not(is_boundary))
        def _full_tile():
            accumulate(False)
    else:
        accumulate(False)

    @pl.when(t == pl.num_programs(1) - 1)
    def _finalize():
        # Single cross-sublane collapse + one tiny store per partial.
        out_ref[...] = jnp.sum(acc_ref[...], axis=0, keepdims=True)[None]


# --------------------------------------------------------------------------- #
# Generation-aware sizing helpers
# --------------------------------------------------------------------------- #
def _vmem_capacity_bytes():
    try:
        info = pltpu.get_tpu_info()
        cap = getattr(info, "vmem_capacity_bytes", None)
        if cap:
            return int(cap)
    except Exception:
        pass
    return 128 * 1024 * 1024  # v5e/v6e default


def _is_dual_tensorcore(vmem_capacity):
    """v7x has two TensorCores per chip (and 64 MiB VMEM/TC); v5e/v6e have one."""
    try:
        kind = jax.devices()[0].device_kind.lower()
        if "v7" in kind:
            return True
    except Exception:
        pass
    return vmem_capacity <= 64 * 1024 * 1024


def _sublane_pack(itemsize):
    # 8 rows/sublane-tile for 4-byte, 16 for bf16, 32 for int8/fp8.
    return max(8, 32 // max(1, itemsize))


def _choose_tile_b(batch, feat, itemsize, per_buffer_budget, sublane):
    """Rows per streaming block: as many as fit in the per-buffer byte budget."""
    bytes_per_row = max(1, feat * itemsize)
    max_rows = per_buffer_budget // bytes_per_row
    if max_rows >= batch:
        return batch                       # whole array in one block (fast path)
    return max(sublane, (max_rows // sublane) * sublane)


# --------------------------------------------------------------------------- #
# Wrapper
# --------------------------------------------------------------------------- #
def sparse_loss_dim(bt, *, dim=2, reduction="batchmean", norm_axis=1,
                    apply_tanh=False, tile_b=None, num_partials=None,
                    input_buffer_count=None):
    """JAX/Pallas wrapper for Sparse_Loss_Dim.forward. Returns a scalar float32."""
    assert bt.ndim == 2, "kernel assumes a (batch, features) latent tensor"
    if dim not in (1, 2):
        # TODO(synk): PyTorch calls os.error('unknown dimension') here (returns None).
        raise ValueError(f"unknown dimension {dim}")
    if dim == 2 and norm_axis not in (0, 1):
        raise ValueError("norm_axis must be 0 or 1 for a 2-D latent")

    batch, feat = bt.shape
    itemsize = jnp.dtype(bt.dtype).itemsize
    sublane = _sublane_pack(itemsize)

    vmem_cap = _vmem_capacity_bytes()
    dual_tc = _is_dual_tensorcore(vmem_cap)
    # Per-input-buffer budget (pipeline double-buffers it):
    #   v7x  (64 MiB/TC)  -> ~8 MiB/buffer  (16 MiB streaming)
    #   v5e/v6e (128 MiB) -> ~16 MiB/buffer (32 MiB streaming)
    per_buffer_budget = max(4 * 1024 * 1024, vmem_cap // 8)

    if tile_b is None:
        tile_b = _choose_tile_b(batch, feat, itemsize, per_buffer_budget, sublane)
    tile_b = min(int(tile_b), batch)
    if tile_b != batch and tile_b % sublane != 0:
        tile_b = min(batch, max(sublane, (tile_b // sublane) * sublane))

    n_tiles = pl.cdiv(batch, tile_b)

    # Partials only pay off when the leading grid axis maps to a second
    # TensorCore (v7x); and only when the split is exact (no duplicate-tile DMAs).
    if num_partials is None:
        num_partials = 2 if dual_tc else 1
    n_part = max(1, min(int(num_partials), n_tiles))
    if n_tiles % n_part != 0:
        n_part = 1
    tiles_per_part = n_tiles // n_part

    needs_mask = (batch % tile_b) != 0
    out_cols = 1 if (dim == 2 and norm_axis == 1) else feat

    kernel = functools.partial(
        _sparse_loss_kernel,
        dim=dim, norm_axis=norm_axis, apply_tanh=apply_tanh,
        tile_b=tile_b, tiles_per_part=tiles_per_part, n_tiles=n_tiles,
        batch=batch, needs_mask=needs_mask)

    def in_index_map(p_, t_):
        return (p_ * tiles_per_part + t_, 0)

    in_spec_kwargs = {}
    if input_buffer_count is not None and int(input_buffer_count) > 2:
        # Opt-in deeper buffering for the forced-small-tile regime.
        in_spec_kwargs["pipeline_mode"] = pl.Buffered(int(input_buffer_count))
    in_spec = pl.BlockSpec((tile_b, feat), in_index_map, **in_spec_kwargs)

    tile_bytes = tile_b * feat * itemsize
    vmem_limit = int(max(16 * 1024 * 1024,
                         min(2 * tile_bytes + (4 << 20), (vmem_cap * 3) // 4)))

    elems = batch * feat
    if dim == 1:
        flops, trans = 2 * elems, 0
    else:
        flops = 3 * elems
        trans = (elems if apply_tanh else 0) + 2 * (batch if norm_axis == 1 else feat)
    cost = pl.CostEstimate(flops=flops, transcendentals=trans,
                           bytes_accessed=elems * itemsize + n_part * out_cols * 4)

    partials = pl.pallas_call(
        kernel,
        grid=(n_part, tiles_per_part),
        in_specs=[in_spec],
        out_specs=pl.BlockSpec((1, 1, out_cols), lambda p_, t_: (p_, 0, 0)),
        out_shape=jax.ShapeDtypeStruct((n_part, 1, out_cols), jnp.float32),
        scratch_shapes=[pltpu.VMEM((8, out_cols), jnp.float32)],
        compiler_params=pltpu.CompilerParams(
            dimension_semantics=("parallel", "arbitrary"),
            vmem_limit_bytes=vmem_limit),
        cost_estimate=cost,
    )(bt)

    # Tiny O(n_part * out_cols) epilogue combining per-partial results.
    is_mean = "mean" in reduction
    if dim == 1:
        per_feat = jnp.sum(partials[:, 0, :], axis=0)          # sum_|x| per feature
        return jnp.mean(per_feat) if is_mean else jnp.sum(per_feat)
    if norm_axis == 1:
        total = jnp.sum(partials[:, 0, 0])
        return total / batch if is_mean else total
    # dim == 2, norm_axis == 0: per-feature L2 over the batch, extra sqrt, reduce.
    feat_sumsq = jnp.sum(partials[:, 0, :], axis=0)
    per_feat = jnp.sqrt(jnp.sqrt(feat_sumsq))
    return jnp.mean(per_feat) if is_mean else jnp.sum(per_feat)


# --------------------------------------------------------------------------- #
# Reference & tests
# --------------------------------------------------------------------------- #
def _reference(bt, *, dim, reduction, norm_axis, apply_tanh):
    """Pure-jnp reference matching the PyTorch semantics."""
    x = bt.astype(jnp.float32)
    if dim == 1:
        pf = jnp.sum(jnp.abs(x), axis=0)
        return jnp.mean(pf) if "mean" in reduction else jnp.sum(pf)
    if apply_tanh:
        x = jnp.tanh(x)
    l2 = jnp.sqrt(jnp.sum(x * x, axis=norm_axis, keepdims=True))
    loss = jnp.sqrt(l2)
    return jnp.mean(loss) if "mean" in reduction else jnp.sum(loss)


if __name__ == "__main__":
    key = jax.random.PRNGKey(0)

    configs = [
        dict(dim=2, reduction="batchmean", norm_axis=1, apply_tanh=False),  # module defaults
        dict(dim=2, reduction="sum", norm_axis=1, apply_tanh=True),
        dict(dim=2, reduction="batchmean", norm_axis=0, apply_tanh=True),
        dict(dim=1, reduction="batchmean", norm_axis=1, apply_tanh=False),
        dict(dim=1, reduction="sum", norm_axis=1, apply_tanh=False),
    ]

    # (1) Non-divisible batch with a forced small tile: multi-tile streaming,
    #     gated boundary masking (only the last tile runs the masked path).
    bt_ragged = jax.random.normal(key, (20, 160), dtype=jnp.float32)
    for cfg in configs:
        got = jax.block_until_ready(sparse_loss_dim(bt_ragged, tile_b=8, **cfg))
        want = jax.block_until_ready(_reference(bt_ragged, **cfg))
        assert jnp.allclose(got, want, rtol=1e-4, atol=1e-4), (cfg, got, want)

    # (2) Same ragged input, auto tile -> single whole-array block fast path
    #     (ragged row count, non-multiple-of-8 accumulation branch).
    for cfg in configs:
        got = jax.block_until_ready(sparse_loss_dim(bt_ragged, **cfg))
        want = jax.block_until_ready(_reference(bt_ragged, **cfg))
        assert jnp.allclose(got, want, rtol=1e-4, atol=1e-4), (cfg, got, want)

    # (3) Aligned shape, auto-chosen tile (single block), f32.
    bt_aligned = jax.random.normal(jax.random.PRNGKey(0), (64, 128), dtype=jnp.float32)
    for cfg in configs:
        got = jax.block_until_ready(sparse_loss_dim(bt_aligned, **cfg))
        want = jax.block_until_ready(_reference(bt_aligned, **cfg))
        assert jnp.allclose(got, want, rtol=1e-4, atol=1e-4), (cfg, got, want)

    # (4) Forced multi-tile with an exact two-partial split (exercises the
    #     dual-TensorCore sharding path; runs serially and correctly on 1 TC).
    for cfg in configs:
        got = jax.block_until_ready(
            sparse_loss_dim(bt_aligned, tile_b=16, num_partials=2, **cfg))
        want = jax.block_until_ready(_reference(bt_aligned, **cfg))
        assert jnp.allclose(got, want, rtol=1e-4, atol=1e-4), (cfg, got, want)

    # (5) bf16 input streamed in native dtype (kernel upcasts to f32 in VMEM);
    #     tile alignment uses the 16-row bf16 sublane packing.
    bt_bf16 = bt_aligned.astype(jnp.bfloat16)
    for cfg in configs[:2]:
        got = jax.block_until_ready(sparse_loss_dim(bt_bf16, **cfg))
        want = jax.block_until_ready(_reference(bt_bf16, **cfg))
        assert jnp.allclose(got, want, rtol=1e-3, atol=1e-3), (cfg, got, want)

    print("KERNEL_OK")
</pallas_src>

<mosaic_0001>
module attributes {stable_mosaic.version = 11 : i64} {
  func.func @_sparse_loss_kernel(%arg0: i32, %arg1: i32, %arg2: memref<8x160xf32, #tpu.memory_space<vmem>>, %arg3: memref<1x1x1xf32, #tpu.memory_space<vmem>>, %arg4: memref<8x1xf32, #tpu.memory_space<vmem>>) attributes {dimension_semantics = [#tpu.dimension_semantics<parallel>, #tpu.dimension_semantics<arbitrary>], iteration_bounds = array<i64: 1, 3>, scalar_prefetch = 0 : i64, scratch_operands = 1 : i64, tpu.core_type = #tpu.core_type<tc>, window_params = [{transform_indices = @transform_0, window_bounds = array<i64: 8, 160>}, {transform_indices = @transform_1, window_bounds = array<i64: 1, 1, 1>}]} {
    %c0_i32 = arith.constant 0 : i32
    %0 = arith.cmpi eq, %arg1, %c0_i32 : i32
    %1 = arith.extui %0 : i1 to i32
    %c0_i32_0 = arith.constant 0 : i32
    %2 = arith.cmpi ne, %1, %c0_i32_0 : i32
    scf.if %2 {
      %cst = arith.constant 0.000000e+00 : f32
      %14 = vector.broadcast %cst : f32 to vector<8x1xf32>
      %c0 = arith.constant 0 : index
      %c0_5 = arith.constant 0 : index
      %15 = vector.load %arg4[%c0, %c0_5] : memref<8x1xf32, #tpu.memory_space<vmem>>, vector<8x1xf32>
      tpu.vector_store %arg4[%c0, %c0_5], %14 {strides = array<i32>} : memref<8x1xf32, #tpu.memory_space<vmem>>, vector<8x1xf32>,
    } else {
    }
    %c3_i32 = arith.constant 3 : i32
    %3 = arith.muli %arg0, %c3_i32 : i32
    %4 = arith.addi %3, %arg1 : i32
    %c2_i32 = arith.constant 2 : i32
    %5 = arith.cmpi eq, %4, %c2_i32 : i32
    %6 = arith.extui %5 : i1 to i32
    %c0_i32_1 = arith.constant 0 : i32
    %7 = arith.cmpi ne, %6, %c0_i32_1 : i32
    scf.if %7 {
      %c0 = arith.constant 0 : index
      %c0_5 = arith.constant 0 : index
      %14 = vector.load %arg2[%c0, %c0_5] : memref<8x160xf32, #tpu.memory_space<vmem>>, vector<8x160xf32>
      %c3_i32_6 = arith.constant 3 : i32
      %15 = arith.muli %arg0, %c3_i32_6 : i32
      %16 = arith.addi %15, %arg1 : i32
      %c8_i32 = arith.constant 8 : i32
      %17 = arith.muli %16, %c8_i32 : i32
      %18 = tpu.iota {dimensions = array<i32: 0>} : vector<8x160xi32>
      %19 = vector.broadcast %17 : i32 to vector<8x160xi32>
      %20 = arith.addi %19, %18 : vector<8x160xi32>
      %c20_i32 = arith.constant 20 : i32
      %21 = vector.broadcast %c20_i32 : i32 to vector<8x160xi32>
      %22 = arith.cmpi slt, %20, %21 : vector<8x160xi32>
      %cst = arith.constant 0.000000e+00 : f32
      %23 = vector.broadcast %cst : f32 to vector<8x160xf32>
      %24 = arith.select %22, %14, %23 : vector<8x160xi1>, vector<8x160xf32>
      %25 = arith.mulf %24, %24 : vector<8x160xf32>
      %cst_7 = arith.constant dense<0.000000e+00> : vector<8xf32>
      %26 = vector.multi_reduction <add>, %25, %cst_7 [1] : vector<8x160xf32> to vector<8xf32>
      %27 = vector.shape_cast %26 : vector<8xf32> to vector<8x1xf32>
      %28 = math.sqrt %27 : vector<8x1xf32>
      %29 = math.sqrt %28 : vector<8x1xf32>
      %c0_8 = arith.constant 0 : index
      %c0_9 = arith.constant 0 : index
      %30 = vector.load %arg4[%c0_8, %c0_9] : memref<8x1xf32, #tpu.memory_space<vmem>>, vector<8x1xf32>
      %31 = arith.addf %30, %29 : vector<8x1xf32>
      %c0_10 = arith.constant 0 : index
      %c0_11 = arith.constant 0 : index
      %32 = vector.load %arg4[%c0_10, %c0_11] : memref<8x1xf32, #tpu.memory_space<vmem>>, vector<8x1xf32>
      tpu.vector_store %arg4[%c0_10, %c0_11], %31 {strides = array<i32>} : memref<8x1xf32, #tpu.memory_space<vmem>>, vector<8x1xf32>,
    } else {
    }
    %true = arith.constant true
    %8 = arith.xori %5, %true : i1
    %9 = arith.extui %8 : i1 to i32
    %c0_i32_2 = arith.constant 0 : i32
    %10 = arith.cmpi ne, %9, %c0_i32_2 : i32
    scf.if %10 {
      %c0 = arith.constant 0 : index
      %c0_5 = arith.constant 0 : index
      %14 = vector.load %arg2[%c0, %c0_5] : memref<8x160xf32, #tpu.memory_space<vmem>>, vector<8x160xf32>
      %15 = arith.mulf %14, %14 : vector<8x160xf32>
      %cst = arith.constant dense<0.000000e+00> : vector<8xf32>
      %16 = vector.multi_reduction <add>, %15, %cst [1] : vector<8x160xf32> to vector<8xf32>
      %17 = vector.shape_cast %16 : vector<8xf32> to vector<8x1xf32>
      %18 = math.sqrt %17 : vector<8x1xf32>
      %19 = math.sqrt %18 : vector<8x1xf32>
      %c0_6 = arith.constant 0 : index
      %c0_7 = arith.constant 0 : index
      %20 = vector.load %arg4[%c0_6, %c0_7] : memref<8x1xf32, #tpu.memory_space<vmem>>, vector<8x1xf32>
      %21 = arith.addf %20, %19 : vector<8x1xf32>
      %c0_8 = arith.constant 0 : index
      %c0_9 = arith.constant 0 : index
      %22 = vector.load %arg4[%c0_8, %c0_9] : memref<8x1xf32, #tpu.memory_space<vmem>>, vector<8x1xf32>
      tpu.vector_store %arg4[%c0_8, %c0_9], %21 {strides = array<i32>} : memref<8x1xf32, #tpu.memory_space<vmem>>, vector<8x1xf32>,
    } else {
    }
    %c2_i32_3 = arith.constant 2 : i32
    %11 = arith.cmpi eq, %arg1, %c2_i32_3 : i32
    %12 = arith.extui %11 : i1 to i32
    %c0_i32_4 = arith.constant 0 : i32
    %13 = arith.cmpi ne, %12, %c0_i32_4 : i32
    scf.if %13 {
      %c0 = arith.constant 0 : index
      %c0_5 = arith.constant 0 : index
      %14 = vector.load %arg4[%c0, %c0_5] : memref<8x1xf32, #tpu.memory_space<vmem>>, vector<8x1xf32>
      %cst = arith.constant dense<0.000000e+00> : vector<1xf32>
      %15 = vector.multi_reduction <add>, %14, %cst [0] : vector<8x1xf32> to vector<1xf32>
      %16 = vector.shape_cast %15 : vector<1xf32> to vector<1x1xf32>
      %17 = vector.shape_cast %16 : vector<1x1xf32> to vector<1x1x1xf32>
      %c0_6 = arith.constant 0 : index
      %c0_7 = arith.constant 0 : index
      %c0_8 = arith.constant 0 : index
      %18 = vector.load %arg3[%c0_6, %c0_7, %c0_8] : memref<1x1x1xf32, #tpu.memory_space<vmem>>, vector<1x1x1xf32>
      tpu.vector_store %arg3[%c0_6, %c0_7, %c0_8], %17 {strides = array<i32>} : memref<1x1x1xf32, #tpu.memory_space<vmem>>, vector<1x1x1xf32>,
    } else {
    }
    return
  }
  func.func @transform_0(%arg0: i32, %arg1: i32) -> (i32, i32) {
    %c3_i32 = arith.constant 3 : i32
    %0 = arith.muli %arg0, %c3_i32 : i32
    %1 = arith.addi %0, %arg1 : i32
    %c0_i32 = arith.constant 0 : i32
    %c0_i32_0 = arith.constant 0 : i32
    return %1, %c0_i32 : i32, i32
  }
  func.func @transform_1(%arg0: i32, %arg1: i32) -> (i32, i32, i32) {
    %c0_i32 = arith.constant 0 : i32
    %c0_i32_0 = arith.constant 0 : i32
    %c0_i32_1 = arith.constant 0 : i32
    return %arg0, %c0_i32, %c0_i32_0 : i32, i32, i32
  }
}

</mosaic_0001>

<llo_original>
// kernel: tpu_custom_call.1
$region0: #{tpu_custom_call.1}
  #allocation0 [shape = 'u32[]', space=smem, size = 0x4, offset = 0x4, fixed_abs, tag = 'smem constant byte address 0x4 - core index']
  #allocation1 [shape = 'u32[144,128]{1,0:T(1,128)}', space=vmem, size = 0x12000, scoped, tag = 'internal scratch']
  #allocation2 [shape = 'f32[8,1]{1,0:T(8,128)}', space=vmem, size = 0x1000, scoped, tag = 'scratch operand']
  %s0 = inlined_call_operand.hbm [shape: f32[20,160], index: 0, kind: input, shape index: {}]
  %s1 = inlined_call_operand.hbm [shape: f32[1,1,1], index: 1, kind: output, shape index: {}]
  %s2 = sld [smem:[#allocation0]]
  $region57: #{tpu_custom_call.1} parent=0
    _
  %s4 = ssub.s32 1, %s2
  %s5 = scalar_select 0, %s4, %s2
  $region1: #{tpu_custom_call.1} parent=0
    #allocation3 [shape = 'u8[16384]{0}', space=vmem, size = 0x4000, scoped, tag = 'input window, operand 0']
    #allocation4 [shape = 's32[2]{0}', space=sflag, size = 0x8, scoped, tag = 'scoped memory for tpu_custom_call.1']
    #allocation5 [shape = 's32[2]{0}', space=sflag, size = 0x8, scoped, tag = 'scoped memory for tpu_custom_call.1']
    #allocation6 [shape = 'u8[512]{0}', space=vmem, size = 0x400, scoped, tag = 'output window, operand 0, single buffered']
    %6 = vsyncpa [#allocation4], 0
    %s7 = scalar_lea.sflag [#allocation4], 1
    %8 = vsyncpa %s7, 0
    %9 = vsyncpa [#allocation5], 0
    loop: start=0, step=1, limit=5
    $region2: #{tpu_custom_call.1} parent=1 // loop_pre_header
      _
    $region3: #{tpu_custom_call.1} parent=1 // loop_header
      %s11 = sphi 0, %s15
      %p12 = scmp.ge.s32.totalorder %s11, 5
      %s18 = sphi 0, %s30
      %s19 = sphi 0, %s26
      %s20 = sphi 0, %s18
      %s21 = sphi 0, %s19
      %s22 = sphi 0, %s20
      %s23 = sphi 0, %s21
      %s37 = sphi 0, %s39
      %s40 = sphi 0, %s37
      %s41 = sphi 0, %s40
      %s57 = sphi 0, %s41
      %s63 = sphi 0, %s65
      %s66 = sphi 0, %s63
      %s67 = sphi 0, %s66
      %s83 = sphi 0, %s67
    $region4: #{tpu_custom_call.1} parent=1 // loop_header_branch
      %14 = sbr.rel (%p12) target = $region8
    $region5: #{tpu_custom_call.1} parent=1 // loop_body
      %s16 = ssub.s32 %s11, 1
      %s17 = ssub.s32 %s11, 2
      %s24 = sadd.s32 1, %s19
      %p25 = scmp.ge.s32.totalorder %s24, 3
      %s26 = scalar_select %p25, 0, %s24
      %s27 = sadd.s32 1, %s18
      %s28 = scalar_select %p25, %s27, %s18
      %p29 = scmp.ge.s32.totalorder %s28, 1
      %s30 = scalar_select %p29, 0, %s28
      %s31 = smul.u32 %s18, 3
      %s32 = sadd.s32 %s31, %s19
      %s33 = smul.u32 %s30, 3
      %s34 = sadd.s32 %s33, %s26
      %s35 = ssub.s32 %s32, %s34
      %p36 = scmp.eq.s32.totalorder %s35, 0
      %s38 = sadd.s32 %s37, 1
      %s39 = scalar_select %p36, %s37, %s38
      %p42 = pneg %p36
      %p43 = scmp.eq.s32.totalorder %s11, 2
      %p44 = por %p42, %p43
      %p45 = scmp.ne.s32.totalorder %s37, %s40
      %p46 = scmp.eq.s32.totalorder %s11, 0
      %p47 = por %p45, %p46
      %p48 = scmp.ne.s32.totalorder %s37, %s40
      %p49 = scmp.eq.s32.totalorder %s16, 2
      %p50 = por %p48, %p49
      %p51 = scmp.ne.s32.totalorder %s40, %s41
      %p52 = scmp.eq.s32.totalorder %s16, 0
      %p53 = por %p51, %p52
      %p54 = scmp.ne.s32.totalorder %s40, %s41
      %p55 = scmp.eq.s32.totalorder %s17, 2
      %p56 = por %p54, %p55
      %p58 = scmp.ne.s32.totalorder %s41, %s57
      %p59 = scmp.eq.s32.totalorder %s17, 0
      %p60 = por %p58, %p59
      %s61 = ssub.s32 %s18, %s30
      %p62 = scmp.eq.s32.totalorder %s61, 0
      %s64 = sadd.s32 %s63, 1
      %s65 = scalar_select %p62, %s63, %s64
      %p68 = pneg %p62
      %p69 = scmp.eq.s32.totalorder %s11, 2
      %p70 = por %p68, %p69
      %p71 = scmp.ne.s32.totalorder %s63, %s66
      %p72 = scmp.eq.s32.totalorder %s11, 0
      %p73 = por %p71, %p72
      %p74 = scmp.ne.s32.totalorder %s63, %s66
      %p75 = scmp.eq.s32.totalorder %s16, 2
      %p76 = por %p74, %p75
      %p77 = scmp.ne.s32.totalorder %s66, %s67
      %p78 = scmp.eq.s32.totalorder %s16, 0
      %p79 = por %p77, %p78
      %p80 = scmp.ne.s32.totalorder %s66, %s67
      %p81 = scmp.eq.s32.totalorder %s17, 2
      %p82 = por %p80, %p81
      %p84 = scmp.ne.s32.totalorder %s67, %s83
      %p85 = scmp.eq.s32.totalorder %s17, 0
      %p86 = por %p84, %p85
      %p87 = scmp.le.s32.totalorder 1, %s11
      %p88 = scmp.lt.s32.totalorder %s11, 4
      %p89 = pnand %p87, %p88
      %p90 = pneg %p89
      // Predicated region
      $region9: #{tpu_custom_call.1} parent=5 // pred_check
        _
      $region10: #{tpu_custom_call.1} parent=5 // pred_check_branch
        %92 = sbr.rel (%p89) target = $region12
      $region11: #{tpu_custom_call.1} parent=5 // pred_region
        %s93 = ssub.s32 %s11, 1
      $region12: #{tpu_custom_call.1} parent=5 // pred_fallthru
        _
      %p94 = scmp.lt.s32.totalorder %s11, 3
      // Predicated region
      $region13: #{tpu_custom_call.1} parent=5 // pred_check
        %p95 = pneg %p94
      $region14: #{tpu_custom_call.1} parent=5 // pred_check_branch
        %97 = sbr.rel (%p95) target = $region16
      $region15: #{tpu_custom_call.1} parent=5 // pred_region
        // Predicated region
        $region17: #{tpu_custom_call.1} parent=15 // pred_check
          %p98 = pneg %p47
        $region18: #{tpu_custom_call.1} parent=15 // pred_check_branch
          %100 = sbr.rel (%p98) target = $region20
        $region19: #{tpu_custom_call.1} parent=15 // pred_region
          %s101 = sand.u32 %s37, 1
          %s102 = scalar_lea.sflag [#allocation4], %s101
          %s103 = sand.u32 %s37, 1
          %s104 = smul.addr %s103, 16
          %s105 = scalar_lea.vmem [#allocation3], %s104
          %s106 = smul.u32 %s18, 3
          %s107 = sadd.s32 %s106, %s19
          %s109 = ssub.s32 256, 256
          %110 = vsyncadd %s102, %s109
          %s111 = smul.addr %s107, 2
          %s112 = smul.addr %s111, 128
          %s113 = scalar_lea.hbm %s0, %s112
          %s115 = sshll.u32 %s105, 4
          %s116 = int_to_ptr.vmem [resolvable:$true] %s115
          %118 = dma.hbm_to_vmem [thread:$0]  %s113, 256, %s116, %s102
        $region20: #{tpu_custom_call.1} parent=15 // pred_fallthru
          _
      $region16: #{tpu_custom_call.1} parent=5 // pred_fallthru
        _
      %p119 = scmp.le.s32.totalorder 1, %s11
      %p120 = scmp.lt.s32.totalorder %s11, 4
      %p121 = pnand %p119, %p120
      %p122 = pneg %p121
      // Predicated region
      $region21: #{tpu_custom_call.1} parent=5 // pred_check
        _
      $region22: #{tpu_custom_call.1} parent=5 // pred_check_branch
        %124 = sbr.rel (%p121) target = $region24
      $region23: #{tpu_custom_call.1} parent=5 // pred_region
        %s125 = ssub.s32 %s11, 1
        %s126 = sand.u32 %s40, 1
        %s127 = scalar_lea.sflag [#allocation4], %s126
        %s128 = sand.u32 %s40, 1
        %s129 = smul.addr %s128, 16
        %s130 = scalar_lea.vmem [#allocation3], %s129
        // Predicated region
        $region25: #{tpu_custom_call.1} parent=23 // pred_check
          %p131 = pneg %p53
        $region26: #{tpu_custom_call.1} parent=23 // pred_check_branch
          %133 = sbr.rel (%p131) target = $region28
        $region27: #{tpu_custom_call.1} parent=23 // pred_region
          %134 = dma.done %s127, 256
        $region28: #{tpu_custom_call.1} parent=23 // pred_fallthru
          _
        %s135 = sand.u32 %s40, 1
        %s136 = scalar_lea.sflag [#allocation4], %s135
        %s137 = sand.u32 %s40, 1
        %s138 = smul.addr %s137, 16
        %s139 = scalar_lea.vmem [#allocation3], %s138
        %p140 = pneg %p53
        %p141 = pneg %p50
        %p142 = pneg %p79
        %p143 = pneg %p76
        %s144 = smul.u32 %s20, 3
        %s145 = sadd.s32 %s144, %s21
        %p146 = scmp.eq.s32.totalorder %s21, 0
        // Predicated region
        $region29: #{tpu_custom_call.1} parent=23 // pred_check
          %p147 = pneg %p146
        $region30: #{tpu_custom_call.1} parent=23 // pred_check_branch
          %149 = sbr.rel (%p147) target = $region32
        $region31: #{tpu_custom_call.1} parent=23 // pred_region
          %vm150 = vcmask 7168
          %151 = vst.msk [vmem:[#allocation2] sm:$0xff] %vm150, 0.0
        $region32: #{tpu_custom_call.1} parent=23 // pred_fallthru
          _
        %s152 = smul.u32 %s20, 3
        %s153 = sadd.s32 %s152, %s21
        %p154 = scmp.eq.s32.totalorder %s153, 2
        // Predicated region
        $region33: #{tpu_custom_call.1} parent=23 // pred_check
          %p155 = pneg %p154
        $region34: #{tpu_custom_call.1} parent=23 // pred_check_branch
          %157 = sbr.rel (%p155) target = $region36
        $region35: #{tpu_custom_call.1} parent=23 // pred_region
          %v158 = vld [vmem:[%s130] sm:$0xff]
          %v159 = vld [vmem:[%s130 + $0x8] sm:$0xff]
          %s160 = smul.u32 %s153, 8
          %v161 = vlaneseq
          %v162 = vshrl.u32 %v161, 7
          %v163 = vstv %s160
          %v164 = vadd.s32 %v163, %v162
          %vm165 = vcmp.lt.s32.totalorder %v164, 20
          %v166 = vsel %vm165, %v158, 0.0
          %v167 = vsel %vm165, %v159, 0.0
          %v168 = vmul.f32 %v166, %v166
          %v169 = vmul.f32 %v167, %v167
          %vm170 = vcmask 261120
          %v171 = vsel %vm170, %v169, 0.0
          %v172 = vadd.f32 %v168, %v171
          %173 = vadd.xlane.f32.xlu0 %v172
          %v174 = vpop.xlane.xlu0 %173
          %v175 = vrsqrt.pop %v174
          %v176 = vmul.f32 %v174, %v175
          %vm177 = vcmp.eq.f32.partialorder %v174, inf
          %v178 = vsel %vm177, %v174, %v176
          %vm179 = vcmp.eq.f32.partialorder %v174, 0.0
          %v180 = vand.u32 %v174, 2147483648
          %v181 = vsel %vm179, %v180, %v178
          %v182 = vrsqrt.pop %v181
          %v183 = vmul.f32 %v181, %v182
          %vm184 = vcmp.eq.f32.partialorder %v181, inf
          %v185 = vsel %vm184, %v181, %v183
          %vm186 = vcmp.eq.f32.partialorder %v181, 0.0
          %v187 = vand.u32 %v181, 2147483648
          %v188 = vsel %vm186, %v187, %v185
          %v189 = vld [vmem:[#allocation2] sm:$0xff]
          %v190 = vadd.f32 %v189, %v188
          %vm191 = vcmask 7168
          %192 = vst.msk [vmem:[#allocation2] sm:$0xff] %vm191, %v190
        $region36: #{tpu_custom_call.1} parent=23 // pred_fallthru
          _
        %p193 = scmp.ne.s32.totalorder %s153, 2
        // Predicated region
        $region37: #{tpu_custom_call.1} parent=23 // pred_check
          %p194 = pneg %p193
        $region38: #{tpu_custom_call.1} parent=23 // pred_check_branch
          %196 = sbr.rel (%p194) target = $region40
        $region39: #{tpu_custom_call.1} parent=23 // pred_region
          %v197 = vld [vmem:[%s130] sm:$0xff]
          %v198 = vld [vmem:[%s130 + $0x8] sm:$0xff]
          %v199 = vmul.f32 %v197, %v197
          %v200 = vmul.f32 %v198, %v198
          %vm201 = vcmask 261120
          %v202 = vsel %vm201, %v200, 0.0
          %v203 = vadd.f32 %v199, %v202
          %204 = vadd.xlane.f32.xlu0 %v203
          %v205 = vpop.xlane.xlu0 %204
          %v206 = vrsqrt.pop %v205
          %v207 = vmul.f32 %v205, %v206
          %vm208 = vcmp.eq.f32.partialorder %v205, inf
          %v209 = vsel %vm208, %v205, %v207
          %vm210 = vcmp.eq.f32.partialorder %v205, 0.0
          %v211 = vand.u32 %v205, 2147483648
          %v212 = vsel %vm210, %v211, %v209
          %v213 = vrsqrt.pop %v212
          %v214 = vmul.f32 %v212, %v213
          %vm215 = vcmp.eq.f32.partialorder %v212, inf
          %v216 = vsel %vm215, %v212, %v214
          %vm217 = vcmp.eq.f32.partialorder %v212, 0.0
          %v218 = vand.u32 %v212, 2147483648
          %v219 = vsel %vm217, %v218, %v216
          %v220 = vld [vmem:[#allocation2] sm:$0xff]
          %v221 = vadd.f32 %v220, %v219
          %vm222 = vcmask 7168
          %223 = vst.msk [vmem:[#allocation2] sm:$0xff] %vm222, %v221
        $region40: #{tpu_custom_call.1} parent=23 // pred_fallthru
          _
        %p224 = scmp.eq.s32.totalorder %s21, 2
        // Predicated region
        $region41: #{tpu_custom_call.1} parent=23 // pred_check
          %p225 = pneg %p224
        $region42: #{tpu_custom_call.1} parent=23 // pred_check_branch
          %227 = sbr.rel (%p225) target = $region44
        $region43: #{tpu_custom_call.1} parent=23 // pred_region
          %v228 = vld [vmem:[#allocation2] sm:$0xff]
          %vm229 = vcmask 7168
          %v230 = vsel %vm229, %v228, 0.0
          %v231 = vrot.slane %v230, 4
          %v232 = vadd.f32 %v230, %v231
          %v233 = vrot.slane %v232, 2
          %v234 = vadd.f32 %v232, %v233
          %v235 = vrot.slane %v234, 1
          %v236 = vadd.f32 %v234, %v235
          %vm237 = vcmask 0
          %238 = vst.msk [vmem:[#allocation6] sm:$0x1] %vm237, %v236
        $region44: #{tpu_custom_call.1} parent=23 // pred_fallthru
          _
        // Predicated region
        $region45: #{tpu_custom_call.1} parent=23 // pred_check
          %p239 = pneg %p76
        $region46: #{tpu_custom_call.1} parent=23 // pred_check_branch
          %241 = sbr.rel (%p239) target = $region48
        $region47: #{tpu_custom_call.1} parent=23 // pred_region
          %s243 = ssub.s32 16, 16
          %244 = vsyncadd [#allocation5], %s243
          %s245 = smul.addr %s20, 16
          %s246 = scalar_lea.hbm %s1, %s245
          %s248 = sshll.u32 [#allocation6], 4
          %s249 = int_to_ptr.vmem [resolvable:$true] %s248
          %251 = dma.vmem_to_hbm [thread:$0]  %s249, 16, %s246, [#allocation5]
        $region48: #{tpu_custom_call.1} parent=23 // pred_fallthru
          _
        // Predicated region
        $region49: #{tpu_custom_call.1} parent=23 // pred_check
          %p252 = pneg %p76
        $region50: #{tpu_custom_call.1} parent=23 // pred_check_branch
          %254 = sbr.rel (%p252) target = $region52
        $region51: #{tpu_custom_call.1} parent=23 // pred_region
          %255 = dma.done [#allocation5], 16
        $region52: #{tpu_custom_call.1} parent=23 // pred_fallthru
          _
      $region24: #{tpu_custom_call.1} parent=5 // pred_fallthru
        _
      %p256 = scmp.le.s32.totalorder 2, %s11
      // Predicated region
      $region53: #{tpu_custom_call.1} parent=5 // pred_check
        %p257 = pneg %p256
      $region54: #{tpu_custom_call.1} parent=5 // pred_check_branch
        %259 = sbr.rel (%p257) target = $region56
      $region55: #{tpu_custom_call.1} parent=5 // pred_region
        %s260 = ssub.s32 %s11, 2
      $region56: #{tpu_custom_call.1} parent=5 // pred_fallthru
        _
    $region6: #{tpu_custom_call.1} parent=1 // loop_footer
      %s15 = sadd.s32 1, %s11
    $region7: #{tpu_custom_call.1} parent=1 // loop_footer_branch
      %10 = sbr.rel target = $region3
    $region8: #{tpu_custom_call.1} parent=1 // loop_exit
      _
    %261 = vsyncpa [#allocation4], 1
    %s262 = scalar_lea.sflag [#allocation4], 1
    %263 = vsyncpa %s262, 1
    %264 = vsyncpa [#allocation5], 1
    %s265 = scalar_lea.sflag [#allocation5], 1
    %266 = vsyncpa %s265, 1

</llo_original>
